<compile_context>
chip_gen: v7x
topology: tpu7x:2x2x1
jax: 0.10.0
libtpu: 0.0.40
codegen_flags: <defaults>
</compile_context>

<pallas_src>
import jax
import jax.numpy as jnp
from jax.experimental import pallas as pl
from jax.experimental.pallas import tpu as pltpu


def linear_kernel(x_ref, w_ref, b_ref, o_ref):
    # x_ref: (TB, D_in)       activations tile (batch on sublanes)
    # w_ref: (D_out, D_in)    PyTorch-layout weight, resident across the grid
    # b_ref: (D_out, 1)       bias column, resident
    # o_ref: (D_out, TB)      transposed logits tile -> batch on the 128-lane axis
    acc = jax.lax.dot_general(
        w_ref[...], x_ref[...],
        # contract D_in of both operands: result[o, b] = sum_k w[o, k] * x[b, k]
        # (same contraction pattern as q @ k.T in flash attention -> native MXU)
        dimension_numbers=(((1,), (1,)), ((), ())),
        preferred_element_type=jnp.float32,
    )
    o_ref[...] = (acc + b_ref[...]).astype(o_ref.dtype)


def _pick_tb(B, block_b):
    """Batch-tile selection: amortize step overhead, keep >=2 steps for v7x."""
    TARGET_STEPS = 4          # >=2 so both TensorCores on v7x get batch tiles
    MIN_ROWS_PER_STEP = 4096  # ~250 KB/step of x traffic; hides ~0.35 us fixed step cost
    tb = max(MIN_ROWS_PER_STEP, pl.cdiv(B, TARGET_STEPS))
    tb = min(tb, max(int(block_b), 128))
    tb = ((tb + 127) // 128) * 128  # multiple of 128: lane-dense out tile + (8,128) rule
    if tb >= B:
        return B                    # single full-extent tile (always legal)
    return tb


def linear_forward(x, weight, bias, *, block_b=16384, small_b_threshold=2048):
    """nn.Linear forward: x @ weight.T + bias.

    x:      (B, D_in)      float32
    weight: (D_out, D_in)  float32  (PyTorch convention, used as-is)
    bias:   (D_out,)       float32
    returns (B, D_out)     float32

    block_b: upper bound on rows per grid step.  Default 16384 is bandwidth-derived
    (middle of ~8K rows on v5e / ~16K v6e / ~32K v7x); override per generation.
    """
    B, D_in = x.shape
    D_out = weight.shape[0]

    # Fast path: at small B the kernel is pure dispatch/DMA overhead; XLA's fused
    # dot is strictly faster.
    if B <= small_b_threshold:
        return x @ weight.T + bias

    TB = _pick_tb(B, block_b)
    grid = (pl.cdiv(B, TB),)

    b_col = bias.reshape(D_out, 1)  # metadata-only reshape; no HBM copy

    out_t = pl.pallas_call(
        linear_kernel,
        out_shape=jax.ShapeDtypeStruct((D_out, B), x.dtype),  # transposed, lane-dense
        grid=grid,
        in_specs=[
            pl.BlockSpec((TB, D_in), lambda i: (i, 0)),      # batch-tiled activations
            pl.BlockSpec((D_out, D_in), lambda i: (0, 0)),   # full weight, resident
            pl.BlockSpec((D_out, 1), lambda i: (0, 0)),      # full bias, resident
        ],
        out_specs=pl.BlockSpec((D_out, TB), lambda i: (0, i)),
        compiler_params=pltpu.CompilerParams(
            dimension_semantics=("parallel",),               # shard batch tiles across TCs
        ),
    )(x, weight, b_col)

    # Back to PyTorch (B, D_out) layout: tiny (2*B floats) wrapper-side transpose.
    return out_t.T


if __name__ == "__main__":
    # Shapes consistent with the module: tabular classifier head.
    num_input = 13      # number of tabular features (num_input in the module)
    output_layer = 2    # binary classification logits

    key = jax.random.PRNGKey(0)
    kx, kw, kb, kx2 = jax.random.split(key, 4)

    # Deterministic parameter init (mimics nn.Linear uniform(-1/sqrt(fan_in), 1/sqrt(fan_in)))
    bound = 1.0 / jnp.sqrt(jnp.float32(num_input))
    weight = jax.random.uniform(kw, (output_layer, num_input), dtype=jnp.float32,
                                minval=-bound, maxval=bound)
    bias = jax.random.uniform(kb, (output_layer,), dtype=jnp.float32,
                              minval=-bound, maxval=bound)

    # 1) Module-sized batch (DataLoader batch_size=32): takes the XLA fast path.
    x_small = jax.random.normal(kx, (32, num_input), dtype=jnp.float32)
    out_small = jax.block_until_ready(linear_forward(x_small, weight, bias))
    ref_small = x_small @ weight.T + bias
    assert out_small.shape == (32, output_layer)
    assert jnp.allclose(out_small, ref_small, atol=1e-5, rtol=1e-5)

    # 2) Bulk-inference batch: exercises the Pallas path with a multi-step grid,
    #    lane-dense transposed stores, and a ragged (masked-writeback) last tile.
    B2 = 4192  # > small_b_threshold, not a multiple of the tile below
    x_big = jax.random.normal(kx2, (B2, num_input), dtype=jnp.float32)
    out_big = jax.block_until_ready(
        linear_forward(x_big, weight, bias, block_b=1024))  # -> TB=1024, grid=(5,)
    ref_big = x_big @ weight.T + bias
    assert out_big.shape == (B2, output_layer)
    assert jnp.allclose(out_big, ref_big, atol=1e-5, rtol=1e-5)

    print("KERNEL_OK")
</pallas_src>

<mosaic_0001>
module attributes {stable_mosaic.version = 11 : i64} {
  func.func @linear_kernel(%arg0: i32, %arg1: memref<1024x13xf32, #tpu.memory_space<vmem>>, %arg2: memref<2x13xf32, #tpu.memory_space<vmem>>, %arg3: memref<2x1xf32, #tpu.memory_space<vmem>>, %arg4: memref<2x1024xf32, #tpu.memory_space<vmem>>) attributes {dimension_semantics = [#tpu.dimension_semantics<parallel>], iteration_bounds = array<i64: 5>, scalar_prefetch = 0 : i64, scratch_operands = 0 : i64, tpu.core_type = #tpu.core_type<tc>, window_params = [{transform_indices = @transform_0, window_bounds = array<i64: 1024, 13>}, {pipeline_mode = #tpu.pipeline_mode<synchronous>, transform_indices = @transform_1, window_bounds = array<i64: 2, 13>}, {pipeline_mode = #tpu.pipeline_mode<synchronous>, transform_indices = @transform_2, window_bounds = array<i64: 2, 1>}, {transform_indices = @transform_3, window_bounds = array<i64: 2, 1024>}]} {
    %c0 = arith.constant 0 : index
    %c0_0 = arith.constant 0 : index
    %0 = vector.load %arg2[%c0, %c0_0] : memref<2x13xf32, #tpu.memory_space<vmem>>, vector<2x13xf32>
    %c0_1 = arith.constant 0 : index
    %c0_2 = arith.constant 0 : index
    %1 = vector.load %arg1[%c0_1, %c0_2] : memref<1024x13xf32, #tpu.memory_space<vmem>>, vector<1024x13xf32>
    %cst = arith.constant dense<0.000000e+00> : vector<2x1024xf32>
    %2 = tpu.matmul %0, %1, %cst {dimension_numbers = #tpu.dot_dimension_numbers<[1], [1], [0], [0], [0, 0, 1, 0], [], []>} : vector<2x13xf32>, vector<1024x13xf32>, vector<2x1024xf32> -> vector<2x1024xf32>
    %c0_3 = arith.constant 0 : index
    %c0_4 = arith.constant 0 : index
    %3 = vector.load %arg3[%c0_3, %c0_4] : memref<2x1xf32, #tpu.memory_space<vmem>>, vector<2x1xf32>
    %4 = vector.broadcast %3 : vector<2x1xf32> to vector<2x1024xf32>
    %5 = arith.addf %2, %4 : vector<2x1024xf32>
    %c0_5 = arith.constant 0 : index
    %c0_6 = arith.constant 0 : index
    %6 = vector.load %arg4[%c0_5, %c0_6] : memref<2x1024xf32, #tpu.memory_space<vmem>>, vector<2x1024xf32>
    tpu.vector_store %arg4[%c0_5, %c0_6], %5 {strides = array<i32>} : memref<2x1024xf32, #tpu.memory_space<vmem>>, vector<2x1024xf32>,
    return
  }
  func.func @transform_0(%arg0: i32) -> (i32, i32) {
    %c0_i32 = arith.constant 0 : i32
    %c0_i32_0 = arith.constant 0 : i32
    return %arg0, %c0_i32 : i32, i32
  }
  func.func @transform_1(%arg0: i32) -> (i32, i32) {
    %c0_i32 = arith.constant 0 : i32
    %c0_i32_0 = arith.constant 0 : i32
    %c0_i32_1 = arith.constant 0 : i32
    return %c0_i32, %c0_i32_0 : i32, i32
  }
  func.func @transform_2(%arg0: i32) -> (i32, i32) {
    %c0_i32 = arith.constant 0 : i32
    %c0_i32_0 = arith.constant 0 : i32
    %c0_i32_1 = arith.constant 0 : i32
    return %c0_i32, %c0_i32_0 : i32, i32
  }
  func.func @transform_3(%arg0: i32) -> (i32, i32) {
    %c0_i32 = arith.constant 0 : i32
    %c0_i32_0 = arith.constant 0 : i32
    return %c0_i32, %arg0 : i32, i32
  }
}

</mosaic_0001>

<llo_original>
// kernel: tpu_custom_call.1
$region0: #{tpu_custom_call.1}
  #allocation0 [shape = 'u32[]', space=smem, size = 0x4, offset = 0x4, fixed_abs, tag = 'smem constant byte address 0x4 - core index']
  #allocation1 [shape = 'u32[144,128]{1,0:T(1,128)}', space=vmem, size = 0x12000, scoped, tag = 'internal scratch']
  %s0 = inlined_call_operand.vmem [shape: f32[4192,13], index: 0, kind: input, shape index: {}]
  %s1 = inlined_call_operand.vmem [shape: f32[2,13], index: 1, kind: input, shape index: {}]
  %s2 = inlined_call_operand.vmem [shape: f32[2,1], index: 2, kind: input, shape index: {}]
  %s3 = inlined_call_operand.hbm [shape: f32[2,4192], index: 3, kind: output, shape index: {}]
  %s4 = sld [smem:[#allocation0]]
  $region45: #{tpu_custom_call.1} parent=0
    _
  %s6 = ssub.s32 1, %s4
  %s7 = scalar_select 0, %s6, %s4
  $region1: #{tpu_custom_call.1} parent=0
    #allocation2 [shape = 'u8[16384]{0}', space=vmem, size = 0x4000, scoped, tag = 'output window, operand 0']
    #allocation3 [shape = 's32[2]{0}', space=sflag, size = 0x8, scoped, tag = 'scoped memory for tpu_custom_call.1']
    %8 = vsyncpa [#allocation3], 0
    %s9 = scalar_lea.sflag [#allocation3], 1
    %10 = vsyncpa %s9, 0
    loop: start=0, step=1, limit=7
    $region2: #{tpu_custom_call.1} parent=1 // loop_pre_header
      _
    $region3: #{tpu_custom_call.1} parent=1 // loop_header
      %s12 = sphi 0, %s16
      %p13 = scmp.ge.s32.totalorder %s12, 7
      %s22 = sphi 0, %s24
      %s25 = sphi 0, %s22
      %s26 = sphi 0, %s25
      %s42 = sphi 0, %s26
      %s46 = sphi 0, %s46
      %s48 = sphi 0, %s46
      %s49 = sphi 0, %s48
      %s63 = sphi 0, %s49
      %s67 = sphi 0, %s67
      %s69 = sphi 0, %s67
      %s70 = sphi 0, %s69
      %s84 = sphi 0, %s70
      %s90 = sphi 0, %s92
      %s93 = sphi 0, %s90
      %s94 = sphi 0, %s93
      %s110 = sphi 0, %s94
    $region4: #{tpu_custom_call.1} parent=1 // loop_header_branch
      %15 = sbr.rel (%p13) target = $region8
    $region5: #{tpu_custom_call.1} parent=1 // loop_body
      %s17 = ssub.s32 %s12, 1
      %s18 = ssub.s32 %s12, 2
      %s19 = sadd.s32 %s12, 1
      %s20 = ssub.s32 %s12, %s19
      %p21 = scmp.eq.s32.totalorder %s20, 0
      %s23 = sadd.s32 %s22, 1
      %s24 = scalar_select %p21, %s22, %s23
      %p27 = pneg %p21
      %p28 = scmp.eq.s32.totalorder %s12, 4
      %p29 = por %p27, %p28
      %p30 = scmp.ne.s32.totalorder %s22, %s25
      %p31 = scmp.eq.s32.totalorder %s12, 0
      %p32 = por %p30, %p31
      %p33 = scmp.ne.s32.totalorder %s22, %s25
      %p34 = scmp.eq.s32.totalorder %s17, 4
      %p35 = por %p33, %p34
      %p36 = scmp.ne.s32.totalorder %s25, %s26
      %p37 = scmp.eq.s32.totalorder %s17, 0
      %p38 = por %p36, %p37
      %p39 = scmp.ne.s32.totalorder %s25, %s26
      %p40 = scmp.eq.s32.totalorder %s18, 4
      %p41 = por %p39, %p40
      %p43 = scmp.ne.s32.totalorder %s26, %s42
      %p44 = scmp.eq.s32.totalorder %s18, 0
      %p45 = por %p43, %p44
      %s47 = sadd.s32 %s46, 1
      %p50 = scmp.eq.s32.totalorder %s12, 4
      %p51 = scmp.ne.s32.totalorder %s46, %s48
      %p52 = scmp.eq.s32.totalorder %s12, 0
      %p53 = por %p51, %p52
      %p54 = scmp.ne.s32.totalorder %s46, %s48
      %p55 = scmp.eq.s32.totalorder %s17, 4
      %p56 = por %p54, %p55
      %p57 = scmp.ne.s32.totalorder %s48, %s49
      %p58 = scmp.eq.s32.totalorder %s17, 0
      %p59 = por %p57, %p58
      %p60 = scmp.ne.s32.totalorder %s48, %s49
      %p61 = scmp.eq.s32.totalorder %s18, 4
      %p62 = por %p60, %p61
      %p64 = scmp.ne.s32.totalorder %s49, %s63
      %p65 = scmp.eq.s32.totalorder %s18, 0
      %p66 = por %p64, %p65
      %s68 = sadd.s32 %s67, 1
      %p71 = scmp.eq.s32.totalorder %s12, 4
      %p72 = scmp.ne.s32.totalorder %s67, %s69
      %p73 = scmp.eq.s32.totalorder %s12, 0
      %p74 = por %p72, %p73
      %p75 = scmp.ne.s32.totalorder %s67, %s69
      %p76 = scmp.eq.s32.totalorder %s17, 4
      %p77 = por %p75, %p76
      %p78 = scmp.ne.s32.totalorder %s69, %s70
      %p79 = scmp.eq.s32.totalorder %s17, 0
      %p80 = por %p78, %p79
      %p81 = scmp.ne.s32.totalorder %s69, %s70
      %p82 = scmp.eq.s32.totalorder %s18, 4
      %p83 = por %p81, %p82
      %p85 = scmp.ne.s32.totalorder %s70, %s84
      %p86 = scmp.eq.s32.totalorder %s18, 0
      %p87 = por %p85, %p86
      %s88 = ssub.s32 %s12, %s19
      %p89 = scmp.eq.s32.totalorder %s88, 0
      %s91 = sadd.s32 %s90, 1
      %s92 = scalar_select %p89, %s90, %s91
      %p95 = pneg %p89
      %p96 = scmp.eq.s32.totalorder %s12, 4
      %p97 = por %p95, %p96
      %p98 = scmp.ne.s32.totalorder %s90, %s93
      %p99 = scmp.eq.s32.totalorder %s12, 0
      %p100 = por %p98, %p99
      %p101 = scmp.ne.s32.totalorder %s90, %s93
      %p102 = scmp.eq.s32.totalorder %s17, 4
      %p103 = por %p101, %p102
      %p104 = scmp.ne.s32.totalorder %s93, %s94
      %p105 = scmp.eq.s32.totalorder %s17, 0
      %p106 = por %p104, %p105
      %p107 = scmp.ne.s32.totalorder %s93, %s94
      %p108 = scmp.eq.s32.totalorder %s18, 4
      %p109 = por %p107, %p108
      %p111 = scmp.ne.s32.totalorder %s94, %s110
      %p112 = scmp.eq.s32.totalorder %s18, 0
      %p113 = por %p111, %p112
      %p114 = scmp.le.s32.totalorder 1, %s12
      %p115 = scmp.lt.s32.totalorder %s12, 6
      %p116 = pnand %p114, %p115
      %p117 = pneg %p116
      // Predicated region
      $region9: #{tpu_custom_call.1} parent=5 // pred_check
        _
      $region10: #{tpu_custom_call.1} parent=5 // pred_check_branch
        %119 = sbr.rel (%p116) target = $region12
      $region11: #{tpu_custom_call.1} parent=5 // pred_region
        %s120 = ssub.s32 %s12, 1
        // Predicated region
        $region13: #{tpu_custom_call.1} parent=11 // pred_check
          %p121 = pneg %p59
        $region14: #{tpu_custom_call.1} parent=11 // pred_check_branch
          %123 = sbr.rel (%p121) target = $region16
        $region15: #{tpu_custom_call.1} parent=11 // pred_region
          _
        $region16: #{tpu_custom_call.1} parent=11 // pred_fallthru
          _
        // Predicated region
        $region17: #{tpu_custom_call.1} parent=11 // pred_check
          %p124 = pneg %p80
        $region18: #{tpu_custom_call.1} parent=11 // pred_check_branch
          %126 = sbr.rel (%p124) target = $region20
        $region19: #{tpu_custom_call.1} parent=11 // pred_region
          _
        $region20: #{tpu_custom_call.1} parent=11 // pred_fallthru
          _
      $region12: #{tpu_custom_call.1} parent=5 // pred_fallthru
        _
      %p127 = scmp.lt.s32.totalorder %s12, 5
      // Predicated region
      $region21: #{tpu_custom_call.1} parent=5 // pred_check
        %p128 = pneg %p127
      $region22: #{tpu_custom_call.1} parent=5 // pred_check_branch
        %130 = sbr.rel (%p128) target = $region24
      $region23: #{tpu_custom_call.1} parent=5 // pred_region
        // Predicated region
        $region25: #{tpu_custom_call.1} parent=23 // pred_check
          %p131 = pneg %p32
        $region26: #{tpu_custom_call.1} parent=23 // pred_check_branch
          %133 = sbr.rel (%p131) target = $region28
        $region27: #{tpu_custom_call.1} parent=23 // pred_region
          %s134 = smul.u32 128, %s12
          %s135 = ssub.s32 524, %s134
          %p136 = scmp.lt.s32.totalorder %s135, 128
          %s137 = scalar_select %p136, %s135, 128
          %s138 = smul.u32 128, %s137
          %p139 = scmp.lt.s32.totalorder %s134, 523
          %s140 = scalar_select %p139, %s134, 523
          %s141 = smul.addr %s140, 8
          %s142 = scalar_lea.vmem %s0, %s141
          %s143 = smul.u32 128, %s12
          %s144 = ssub.s32 524, %s143
          %p145 = scmp.lt.s32.totalorder %s144, 128
          %s146 = scalar_select %p145, %s144, 128
          %s147 = smul.u32 128, %s146
        $region28: #{tpu_custom_call.1} parent=23 // pred_fallthru
          _
      $region24: #{tpu_custom_call.1} parent=5 // pred_fallthru
        _
      %p148 = scmp.le.s32.totalorder 1, %s12
      %p149 = scmp.lt.s32.totalorder %s12, 6
      %p150 = pnand %p148, %p149
      %p151 = pneg %p150
      // Predicated region
      $region29: #{tpu_custom_call.1} parent=5 // pred_check
        _
      $region30: #{tpu_custom_call.1} parent=5 // pred_check_branch
        %153 = sbr.rel (%p150) target = $region32
      $region31: #{tpu_custom_call.1} parent=5 // pred_region
        %s154 = ssub.s32 %s12, 1
        %s155 = smul.u32 128, %s17
        %s156 = ssub.s32 524, %s155
        %p157 = scmp.lt.s32.totalorder %s156, 128
        %s158 = scalar_select %p157, %s156, 128
        %s159 = smul.u32 128, %s158
        %p160 = scmp.lt.s32.totalorder %s155, 523
        %s161 = scalar_select %p160, %s155, 523
        %s162 = smul.addr %s161, 8
        %s163 = scalar_lea.vmem %s0, %s162
        %p164 = pneg %p38
        %p165 = pneg %p35
        %p166 = pneg %p59
        %p167 = pneg %p56
        %p168 = pneg %p80
        %p169 = pneg %p77
        %p170 = pneg %p106
        %p171 = pneg %p103
        %s172 = sand.u32 %s93, 1
        %s173 = scalar_lea.sflag [#allocation3], %s172
        %s174 = sand.u32 %s93, 1
        %s175 = smul.addr %s174, 16
        %s176 = scalar_lea.vmem [#allocation2], %s175
        %s177 = smul.u32 128, %s17
        %s178 = ssub.s32 524, %s177
        %p179 = scmp.lt.s32.totalorder %s178, 128
        %s180 = scalar_select %p179, %s178, 128
        %s181 = smul.u32 128, %s180
        %p182 = scmp.lt.s32.totalorder %s177, 523
        %s183 = scalar_select %p182, %s177, 523
        %s184 = smul.addr %s183, 8
        %s185 = scalar_lea.vmem %s0, %s184
        %s186 = smul.u32 128, %s17
        %s187 = ssub.s32 524, %s186
        %p188 = scmp.lt.s32.totalorder %s187, 128
        %s189 = scalar_select %p188, %s187, 128
        %s190 = smul.u32 128, %s189
        %s191 = smul.u32 8, %s17
        %s192 = ssub.s32 33, %s191
        %p193 = scmp.lt.s32.totalorder %s192, 8
        %s194 = scalar_select %p193, %s192, 8
        %s195 = smul.u32 32, %s194
        %v196 = vld [vmem:[%s1] sm:$0x3]
        %v197 = vld [vmem:[%s185] sm:$0xff]
        %v198 = vld [vmem:[%s185 + $0x8] sm:$0xff]
        %v199 = vld [vmem:[%s185 + $0x10] sm:$0xff]
        %v200 = vld [vmem:[%s185 + $0x18] sm:$0xff]
        %v201 = vld [vmem:[%s185 + $0x20] sm:$0xff]
        %v202 = vld [vmem:[%s185 + $0x28] sm:$0xff]
        %v203 = vld [vmem:[%s185 + $0x30] sm:$0xff]
        %v204 = vld [vmem:[%s185 + $0x38] sm:$0xff]
        %v205 = vld [vmem:[%s185 + $0x40] sm:$0xff]
        %v206 = vld [vmem:[%s185 + $0x48] sm:$0xff]
        %v207 = vld [vmem:[%s185 + $0x50] sm:$0xff]
        %v208 = vld [vmem:[%s185 + $0x58] sm:$0xff]
        %v209 = vld [vmem:[%s185 + $0x60] sm:$0xff]
        %v210 = vld [vmem:[%s185 + $0x68] sm:$0xff]
        %v211 = vld [vmem:[%s185 + $0x70] sm:$0xff]
        %v212 = vld [vmem:[%s185 + $0x78] sm:$0xff]
        %v213 = vld [vmem:[%s185 + $0x80] sm:$0xff]
        %v214 = vld [vmem:[%s185 + $0x88] sm:$0xff]
        %v215 = vld [vmem:[%s185 + $0x90] sm:$0xff]
        %v216 = vld [vmem:[%s185 + $0x98] sm:$0xff]
        %v217 = vld [vmem:[%s185 + $0xa0] sm:$0xff]
        %v218 = vld [vmem:[%s185 + $0xa8] sm:$0xff]
        %v219 = vld [vmem:[%s185 + $0xb0] sm:$0xff]
        %v220 = vld [vmem:[%s185 + $0xb8] sm:$0xff]
        %v221 = vld [vmem:[%s185 + $0xc0] sm:$0xff]
        %v222 = vld [vmem:[%s185 + $0xc8] sm:$0xff]
        %v223 = vld [vmem:[%s185 + $0xd0] sm:$0xff]
        %v224 = vld [vmem:[%s185 + $0xd8] sm:$0xff]
        %v225 = vld [vmem:[%s185 + $0xe0] sm:$0xff]
        %v226 = vld [vmem:[%s185 + $0xe8] sm:$0xff]
        %v227 = vld [vmem:[%s185 + $0xf0] sm:$0xff]
        %v228 = vld [vmem:[%s185 + $0xf8] sm:$0xff]
        %v229 = vld [vmem:[%s185 + $0x100] sm:$0xff]
        %v230 = vld [vmem:[%s185 + $0x108] sm:$0xff]
        %v231 = vld [vmem:[%s185 + $0x110] sm:$0xff]
        %v232 = vld [vmem:[%s185 + $0x118] sm:$0xff]
        %v233 = vld [vmem:[%s185 + $0x120] sm:$0xff]
        %v234 = vld [vmem:[%s185 + $0x128] sm:$0xff]
        %v235 = vld [vmem:[%s185 + $0x130] sm:$0xff]
        %v236 = vld [vmem:[%s185 + $0x138] sm:$0xff]
        %v237 = vld [vmem:[%s185 + $0x140] sm:$0xff]
        %v238 = vld [vmem:[%s185 + $0x148] sm:$0xff]
        %v239 = vld [vmem:[%s185 + $0x150] sm:$0xff]
        %v240 = vld [vmem:[%s185 + $0x158] sm:$0xff]
        %v241 = vld [vmem:[%s185 + $0x160] sm:$0xff]
        %v242 = vld [vmem:[%s185 + $0x168] sm:$0xff]
        %v243 = vld [vmem:[%s185 + $0x170] sm:$0xff]
        %v244 = vld [vmem:[%s185 + $0x178] sm:$0xff]
        %v245 = vld [vmem:[%s185 + $0x180] sm:$0xff]
        %v246 = vld [vmem:[%s185 + $0x188] sm:$0xff]
        %v247 = vld [vmem:[%s185 + $0x190] sm:$0xff]
        %v248 = vld [vmem:[%s185 + $0x198] sm:$0xff]
        %v249 = vld [vmem:[%s185 + $0x1a0] sm:$0xff]
        %v250 = vld [vmem:[%s185 + $0x1a8] sm:$0xff]
        %v251 = vld [vmem:[%s185 + $0x1b0] sm:$0xff]
        %v252 = vld [vmem:[%s185 + $0x1b8] sm:$0xff]
        %v253 = vld [vmem:[%s185 + $0x1c0] sm:$0xff]
        %v254 = vld [vmem:[%s185 + $0x1c8] sm:$0xff]
        %v255 = vld [vmem:[%s185 + $0x1d0] sm:$0xff]
        %v256 = vld [vmem:[%s185 + $0x1d8] sm:$0xff]
        %v257 = vld [vmem:[%s185 + $0x1e0] sm:$0xff]
        %v258 = vld [vmem:[%s185 + $0x1e8] sm:$0xff]
        %v259 = vld [vmem:[%s185 + $0x1f0] sm:$0xff]
        %v260 = vld [vmem:[%s185 + $0x1f8] sm:$0xff]
        %v261 = vld [vmem:[%s185 + $0x200] sm:$0xff]
        %v262 = vld [vmem:[%s185 + $0x208] sm:$0xff]
        %v263 = vld [vmem:[%s185 + $0x210] sm:$0xff]
        %v264 = vld [vmem:[%s185 + $0x218] sm:$0xff]
        %v265 = vld [vmem:[%s185 + $0x220] sm:$0xff]
        %v266 = vld [vmem:[%s185 + $0x228] sm:$0xff]
        %v267 = vld [vmem:[%s185 + $0x230] sm:$0xff]
        %v268 = vld [vmem:[%s185 + $0x238] sm:$0xff]
        %v269 = vld [vmem:[%s185 + $0x240] sm:$0xff]
        %v270 = vld [vmem:[%s185 + $0x248] sm:$0xff]
        %v271 = vld [vmem:[%s185 + $0x250] sm:$0xff]
        %v272 = vld [vmem:[%s185 + $0x258] sm:$0xff]
        %v273 = vld [vmem:[%s185 + $0x260] sm:$0xff]
        %v274 = vld [vmem:[%s185 + $0x268] sm:$0xff]
        %v275 = vld [vmem:[%s185 + $0x270] sm:$0xff]
        %v276 = vld [vmem:[%s185 + $0x278] sm:$0xff]
        %v277 = vld [vmem:[%s185 + $0x280] sm:$0xff]
        %v278 = vld [vmem:[%s185 + $0x288] sm:$0xff]
        %v279 = vld [vmem:[%s185 + $0x290] sm:$0xff]
        %v280 = vld [vmem:[%s185 + $0x298] sm:$0xff]
        %v281 = vld [vmem:[%s185 + $0x2a0] sm:$0xff]
        %v282 = vld [vmem:[%s185 + $0x2a8] sm:$0xff]
        %v283 = vld [vmem:[%s185 + $0x2b0] sm:$0xff]
        %v284 = vld [vmem:[%s185 + $0x2b8] sm:$0xff]
        %v285 = vld [vmem:[%s185 + $0x2c0] sm:$0xff]
        %v286 = vld [vmem:[%s185 + $0x2c8] sm:$0xff]
        %v287 = vld [vmem:[%s185 + $0x2d0] sm:$0xff]
        %v288 = vld [vmem:[%s185 + $0x2d8] sm:$0xff]
        %v289 = vld [vmem:[%s185 + $0x2e0] sm:$0xff]
        %v290 = vld [vmem:[%s185 + $0x2e8] sm:$0xff]
        %v291 = vld [vmem:[%s185 + $0x2f0] sm:$0xff]
        %v292 = vld [vmem:[%s185 + $0x2f8] sm:$0xff]
        %v293 = vld [vmem:[%s185 + $0x300] sm:$0xff]
        %v294 = vld [vmem:[%s185 + $0x308] sm:$0xff]
        %v295 = vld [vmem:[%s185 + $0x310] sm:$0xff]
        %v296 = vld [vmem:[%s185 + $0x318] sm:$0xff]
        %v297 = vld [vmem:[%s185 + $0x320] sm:$0xff]
        %v298 = vld [vmem:[%s185 + $0x328] sm:$0xff]
        %v299 = vld [vmem:[%s185 + $0x330] sm:$0xff]
        %v300 = vld [vmem:[%s185 + $0x338] sm:$0xff]
        %v301 = vld [vmem:[%s185 + $0x340] sm:$0xff]
        %v302 = vld [vmem:[%s185 + $0x348] sm:$0xff]
        %v303 = vld [vmem:[%s185 + $0x350] sm:$0xff]
        %v304 = vld [vmem:[%s185 + $0x358] sm:$0xff]
        %v305 = vld [vmem:[%s185 + $0x360] sm:$0xff]
        %v306 = vld [vmem:[%s185 + $0x368] sm:$0xff]
        %v307 = vld [vmem:[%s185 + $0x370] sm:$0xff]
        %v308 = vld [vmem:[%s185 + $0x378] sm:$0xff]
        %v309 = vld [vmem:[%s185 + $0x380] sm:$0xff]
        %v310 = vld [vmem:[%s185 + $0x388] sm:$0xff]
        %v311 = vld [vmem:[%s185 + $0x390] sm:$0xff]
        %v312 = vld [vmem:[%s185 + $0x398] sm:$0xff]
        %v313 = vld [vmem:[%s185 + $0x3a0] sm:$0xff]
        %v314 = vld [vmem:[%s185 + $0x3a8] sm:$0xff]
        %v315 = vld [vmem:[%s185 + $0x3b0] sm:$0xff]
        %v316 = vld [vmem:[%s185 + $0x3b8] sm:$0xff]
        %v317 = vld [vmem:[%s185 + $0x3c0] sm:$0xff]
        %v318 = vld [vmem:[%s185 + $0x3c8] sm:$0xff]
        %v319 = vld [vmem:[%s185 + $0x3d0] sm:$0xff]
        %v320 = vld [vmem:[%s185 + $0x3d8] sm:$0xff]
        %v321 = vld [vmem:[%s185 + $0x3e0] sm:$0xff]
        %v322 = vld [vmem:[%s185 + $0x3e8] sm:$0xff]
        %v323 = vld [vmem:[%s185 + $0x3f0] sm:$0xff]
        %v324 = vld [vmem:[%s185 + $0x3f8] sm:$0xff]
        %v325 = vld [vmem:[%s2] sm:$0x3]
        %327 = vset.pattern.permute.xlu0 0
        %328 = vperm.xlu0 %327, %v325
        %v329 = vpop.permute.xlu0 %328
        %vm331 = vcmask 105472
        %v333 = vsel %vm331, %v196, 0
        %v336 = vsel %vm331, %v197, 0
        %v339 = vsel %vm331, %v198, 0
        %v342 = vsel %vm331, %v199, 0
        %v345 = vsel %vm331, %v200, 0
        %v348 = vsel %vm331, %v201, 0
        %v351 = vsel %vm331, %v202, 0
        %v354 = vsel %vm331, %v203, 0
        %v357 = vsel %vm331, %v204, 0
        %v360 = vsel %vm331, %v205, 0
        %v363 = vsel %vm331, %v206, 0
        %v366 = vsel %vm331, %v207, 0
        %v369 = vsel %vm331, %v208, 0
        %v372 = vsel %vm331, %v209, 0
        %v375 = vsel %vm331, %v210, 0
        %v378 = vsel %vm331, %v211, 0
        %v381 = vsel %vm331, %v212, 0
        %v384 = vsel %vm331, %v213, 0
        %v387 = vsel %vm331, %v214, 0
        %v390 = vsel %vm331, %v215, 0
        %v393 = vsel %vm331, %v216, 0
        %v396 = vsel %vm331, %v217, 0
        %v399 = vsel %vm331, %v218, 0
        %v402 = vsel %vm331, %v219, 0
        %v405 = vsel %vm331, %v220, 0
        %v408 = vsel %vm331, %v221, 0
        %v411 = vsel %vm331, %v222, 0
        %v414 = vsel %vm331, %v223, 0
        %v417 = vsel %vm331, %v224, 0
        %v420 = vsel %vm331, %v225, 0
        %v423 = vsel %vm331, %v226, 0
        %v426 = vsel %vm331, %v227, 0
        %v429 = vsel %vm331, %v228, 0
        %v432 = vsel %vm331, %v229, 0
        %v435 = vsel %vm331, %v230, 0
        %v438 = vsel %vm331, %v231, 0
        %v441 = vsel %vm331, %v232, 0
        %v444 = vsel %vm331, %v233, 0
        %v447 = vsel %vm331, %v234, 0
        %v450 = vsel %vm331, %v235, 0
        %v453 = vsel %vm331, %v236, 0
        %v456 = vsel %vm331, %v237, 0
        %v459 = vsel %vm331, %v238, 0
        %v462 = vsel %vm331, %v239, 0
        %v465 = vsel %vm331, %v240, 0
        %v468 = vsel %vm331, %v241, 0
        %v471 = vsel %vm331, %v242, 0
        %v474 = vsel %vm331, %v243, 0
        %v477 = vsel %vm331, %v244, 0
        %v480 = vsel %vm331, %v245, 0
        %v483 = vsel %vm331, %v246, 0
        %v486 = vsel %vm331, %v247, 0
        %v489 = vsel %vm331, %v248, 0
        %v492 = vsel %vm331, %v249, 0
        %v495 = vsel %vm331, %v250, 0
        %v498 = vsel %vm331, %v251, 0
        %v501 = vsel %vm331, %v252, 0
        %v504 = vsel %vm331, %v253, 0
        %v507 = vsel %vm331, %v254, 0
        %v510 = vsel %vm331, %v255, 0
        %v513 = vsel %vm331, %v256, 0
        %v516 = vsel %vm331, %v257, 0
        %v519 = vsel %vm331, %v258, 0
        %v522 = vsel %vm331, %v259, 0
        %v525 = vsel %vm331, %v260, 0
        %v528 = vsel %vm331, %v261, 0
        %v531 = vsel %vm331, %v262, 0
        %v534 = vsel %vm331, %v263, 0
        %v537 = vsel %vm331, %v264, 0
        %v540 = vsel %vm331, %v265, 0
        %v543 = vsel %vm331, %v266, 0
        %v546 = vsel %vm331, %v267, 0
        %v549 = vsel %vm331, %v268, 0
        %v552 = vsel %vm331, %v269, 0
        %v555 = vsel %vm331, %v270, 0
        %v558 = vsel %vm331, %v271, 0
        %v561 = vsel %vm331, %v272, 0
        %v564 = vsel %vm331, %v273, 0
        %v567 = vsel %vm331, %v274, 0
        %v570 = vsel %vm331, %v275, 0
        %v573 = vsel %vm331, %v276, 0
        %v576 = vsel %vm331, %v277, 0
        %v579 = vsel %vm331, %v278, 0
        %v582 = vsel %vm331, %v279, 0
        %v585 = vsel %vm331, %v280, 0
        %v588 = vsel %vm331, %v281, 0
        %v591 = vsel %vm331, %v282, 0
        %v594 = vsel %vm331, %v283, 0
        %v597 = vsel %vm331, %v284, 0
        %v600 = vsel %vm331, %v285, 0
        %v603 = vsel %vm331, %v286, 0
        %v606 = vsel %vm331, %v287, 0
        %v609 = vsel %vm331, %v288, 0
        %v612 = vsel %vm331, %v289, 0
        %v615 = vsel %vm331, %v290, 0
        %v618 = vsel %vm331, %v291, 0
        %v621 = vsel %vm331, %v292, 0
        %v624 = vsel %vm331, %v293, 0
        %v627 = vsel %vm331, %v294, 0
        %v630 = vsel %vm331, %v295, 0
        %v633 = vsel %vm331, %v296, 0
        %v636 = vsel %vm331, %v297, 0
        %v639 = vsel %vm331, %v298, 0
        %v642 = vsel %vm331, %v299, 0
        %v645 = vsel %vm331, %v300, 0
        %v648 = vsel %vm331, %v301, 0
        %v651 = vsel %vm331, %v302, 0
        %v654 = vsel %vm331, %v303, 0
        %v657 = vsel %vm331, %v304, 0
        %v660 = vsel %vm331, %v305, 0
        %v663 = vsel %vm331, %v306, 0
        %v666 = vsel %vm331, %v307, 0
        %v669 = vsel %vm331, %v308, 0
        %v672 = vsel %vm331, %v309, 0
        %v675 = vsel %vm331, %v310, 0
        %v678 = vsel %vm331, %v311, 0
        %v681 = vsel %vm331, %v312, 0
        %v684 = vsel %vm331, %v313, 0
        %v687 = vsel %vm331, %v314, 0
        %v690 = vsel %vm331, %v315, 0
        %v693 = vsel %vm331, %v316, 0
        %v696 = vsel %vm331, %v317, 0
        %v699 = vsel %vm331, %v318, 0
        %v702 = vsel %vm331, %v319, 0
        %v705 = vsel %vm331, %v320, 0
        %v708 = vsel %vm331, %v321, 0
        %v711 = vsel %vm331, %v322, 0
        %v714 = vsel %vm331, %v323, 0
        %v717 = vsel %vm331, %v324, 0
        %719 = vmatprep.subr.mxu0 0.0
        %720 = vmatpush1.xpose.msra.mxu0 %v336
        %721 = vmatprep.subr.mxu0 0.0
        %722 = vmatpush1.xpose.msra.mxu0 %v339
        %723 = vmatprep.subr.mxu0 0.0
        %724 = vmatpush1.xpose.msra.mxu0 %v342
        %725 = vmatprep.subr.mxu0 0.0
        %726 = vmatpush1.xpose.msra.mxu0 %v345
        %727 = vmatprep.subr.mxu0 0.0
        %728 = vmatpush1.xpose.msra.mxu0 %v348
        %729 = vmatprep.subr.mxu0 0.0
        %730 = vmatpush1.xpose.msra.mxu0 %v351
        %731 = vmatprep.subr.mxu0 0.0
        %732 = vmatpush1.xpose.msra.mxu0 %v354
        %733 = vmatprep.subr.mxu0 0.0
        %734 = vmatpush1.xpose.msra.mxu0 %v357
        %735 = vmatprep.subr.mxu0 0.0
        %736 = vmatpush1.xpose.msra.mxu0 %v360
        %737 = vmatprep.subr.mxu0 0.0
        %738 = vmatpush1.xpose.msra.mxu0 %v363
        %739 = vmatprep.subr.mxu0 0.0
        %740 = vmatpush1.xpose.msra.mxu0 %v366
        %741 = vmatprep.subr.mxu0 0.0
        %742 = vmatpush1.xpose.msra.mxu0 %v369
        %743 = vmatprep.subr.mxu0 0.0
        %744 = vmatpush1.xpose.msra.mxu0 %v372
        %745 = vmatprep.subr.mxu0 0.0
        %746 = vmatpush1.xpose.msra.mxu0 %v375
        %747 = vmatprep.subr.mxu0 0.0
        %748 = vmatpush1.xpose.msra.mxu0 %v378
        %749 = vmatprep.subr.mxu0 0.0
        %750 = vmatpush1.xpose.msra.mxu0 %v381
        %751 = vmatprep.subr.mxu0 0.0
        %752 = vmatpush1.xpose.msra.mxu0 %v384
        %753 = vmatprep.subr.mxu0 0.0
        %754 = vmatpush1.xpose.msra.mxu0 %v387
        %755 = vmatprep.subr.mxu0 0.0
        %756 = vmatpush1.xpose.msra.mxu0 %v390
        %757 = vmatprep.subr.mxu0 0.0
        %758 = vmatpush1.xpose.msra.mxu0 %v393
        %759 = vmatprep.subr.mxu0 0.0
        %760 = vmatpush1.xpose.msra.mxu0 %v396
        %761 = vmatprep.subr.mxu0 0.0
        %762 = vmatpush1.xpose.msra.mxu0 %v399
        %763 = vmatprep.subr.mxu0 0.0
        %764 = vmatpush1.xpose.msra.mxu0 %v402
        %765 = vmatprep.subr.mxu0 0.0
        %766 = vmatpush1.xpose.msra.mxu0 %v405
        %767 = vmatprep.subr.mxu0 0.0
        %768 = vmatpush1.xpose.msra.mxu0 %v408
        %769 = vmatprep.subr.mxu0 0.0
        %770 = vmatpush1.xpose.msra.mxu0 %v411
        %771 = vmatprep.subr.mxu0 0.0
        %772 = vmatpush1.xpose.msra.mxu0 %v414
        %773 = vmatprep.subr.mxu0 0.0
        %774 = vmatpush1.xpose.msra.mxu0 %v417
        %775 = vmatprep.subr.mxu0 0.0
        %776 = vmatpush1.xpose.msra.mxu0 %v420
        %777 = vmatprep.subr.mxu0 0.0
        %778 = vmatpush1.xpose.msra.mxu0 %v423
        %779 = vmatprep.subr.mxu0 0.0
        %780 = vmatpush1.xpose.msra.mxu0 %v426
        %781 = vmatprep.subr.mxu0 0.0
        %782 = vmatpush1.xpose.msra.mxu0 %v429
        %783 = vmatprep.mubr.f32.mxu0 0.0
        %784 = vmatmul.mubr.f32.gmra.mrb[0].mxu0 %v333
        %v785 = vpop.f32.mrb[0].mxu0
        %v786 = vadd.f32 %v329, %v785
        %v787 = vpop.f32.mrb[0].mxu0
        %v788 = vadd.f32 %v329, %v787
        %789 = vdwg.mxu0
        %790 = vmatprep.subr.mxu0 0.0
        %791 = vmatpush1.xpose.msra.mxu0 %v432
        %792 = vmatprep.subr.mxu0 0.0
        %793 = vmatpush1.xpose.msra.mxu0 %v435
        %794 = vmatprep.subr.mxu0 0.0
        %795 = vmatpush1.xpose.msra.mxu0 %v438
        %796 = vmatprep.subr.mxu0 0.0
        %797 = vmatpush1.xpose.msra.mxu0 %v441
        %798 = vmatprep.subr.mxu0 0.0
        %799 = vmatpush1.xpose.msra.mxu0 %v444
        %800 = vmatprep.subr.mxu0 0.0
        %801 = vmatpush1.xpose.msra.mxu0 %v447
        %802 = vmatprep.subr.mxu0 0.0
        %803 = vmatpush1.xpose.msra.mxu0 %v450
        %804 = vmatprep.subr.mxu0 0.0
        %805 = vmatpush1.xpose.msra.mxu0 %v453
        %806 = vmatprep.subr.mxu0 0.0
        %807 = vmatpush1.xpose.msra.mxu0 %v456
        %808 = vmatprep.subr.mxu0 0.0
        %809 = vmatpush1.xpose.msra.mxu0 %v459
        %810 = vmatprep.subr.mxu0 0.0
        %811 = vmatpush1.xpose.msra.mxu0 %v462
        %812 = vmatprep.subr.mxu0 0.0
        %813 = vmatpush1.xpose.msra.mxu0 %v465
        %814 = vmatprep.subr.mxu0 0.0
        %815 = vmatpush1.xpose.msra.mxu0 %v468
        %816 = vmatprep.subr.mxu0 0.0
        %817 = vmatpush1.xpose.msra.mxu0 %v471
        %818 = vmatprep.subr.mxu0 0.0
        %819 = vmatpush1.xpose.msra.mxu0 %v474
        %820 = vmatprep.subr.mxu0 0.0
        %821 = vmatpush1.xpose.msra.mxu0 %v477
        %822 = vmatprep.subr.mxu0 0.0
        %823 = vmatpush1.xpose.msra.mxu0 %v480
        %824 = vmatprep.subr.mxu0 0.0
        %825 = vmatpush1.xpose.msra.mxu0 %v483
        %826 = vmatprep.subr.mxu0 0.0
        %827 = vmatpush1.xpose.msra.mxu0 %v486
        %828 = vmatprep.subr.mxu0 0.0
        %829 = vmatpush1.xpose.msra.mxu0 %v489
        %830 = vmatprep.subr.mxu0 0.0
        %831 = vmatpush1.xpose.msra.mxu0 %v492
        %832 = vmatprep.subr.mxu0 0.0
        %833 = vmatpush1.xpose.msra.mxu0 %v495
        %834 = vmatprep.subr.mxu0 0.0
        %835 = vmatpush1.xpose.msra.mxu0 %v498
        %836 = vmatprep.subr.mxu0 0.0
        %837 = vmatpush1.xpose.msra.mxu0 %v501
        %838 = vmatprep.subr.mxu0 0.0
        %839 = vmatpush1.xpose.msra.mxu0 %v504
        %840 = vmatprep.subr.mxu0 0.0
        %841 = vmatpush1.xpose.msra.mxu0 %v507
        %842 = vmatprep.subr.mxu0 0.0
        %843 = vmatpush1.xpose.msra.mxu0 %v510
        %844 = vmatprep.subr.mxu0 0.0
        %845 = vmatpush1.xpose.msra.mxu0 %v513
        %846 = vmatprep.subr.mxu0 0.0
        %847 = vmatpush1.xpose.msra.mxu0 %v516
        %848 = vmatprep.subr.mxu0 0.0
        %849 = vmatpush1.xpose.msra.mxu0 %v519
        %850 = vmatprep.subr.mxu0 0.0
        %851 = vmatpush1.xpose.msra.mxu0 %v522
        %852 = vmatprep.subr.mxu0 0.0
        %853 = vmatpush1.xpose.msra.mxu0 %v525
        %854 = vmatprep.mubr.f32.mxu0 0.0
        %855 = vmatmul.mubr.f32.gmra.mrb[0].mxu0 %v333
        %v856 = vpop.f32.mrb[0].mxu0
        %v857 = vadd.f32 %v329, %v856
        %v858 = vpop.f32.mrb[0].mxu0
        %v859 = vadd.f32 %v329, %v858
        %860 = vdwg.mxu0
        %861 = vmatprep.subr.mxu0 0.0
        %862 = vmatpush1.xpose.msra.mxu0 %v528
        %863 = vmatprep.subr.mxu0 0.0
        %864 = vmatpush1.xpose.msra.mxu0 %v531
        %865 = vmatprep.subr.mxu0 0.0
        %866 = vmatpush1.xpose.msra.mxu0 %v534
        %867 = vmatprep.subr.mxu0 0.0
        %868 = vmatpush1.xpose.msra.mxu0 %v537
        %869 = vmatprep.subr.mxu0 0.0
        %870 = vmatpush1.xpose.msra.mxu0 %v540
        %871 = vmatprep.subr.mxu0 0.0
        %872 = vmatpush1.xpose.msra.mxu0 %v543
        %873 = vmatprep.subr.mxu0 0.0
        %874 = vmatpush1.xpose.msra.mxu0 %v546
        %875 = vmatprep.subr.mxu0 0.0
        %876 = vmatpush1.xpose.msra.mxu0 %v549
        %877 = vmatprep.subr.mxu0 0.0
        %878 = vmatpush1.xpose.msra.mxu0 %v552
        %879 = vmatprep.subr.mxu0 0.0
        %880 = vmatpush1.xpose.msra.mxu0 %v555
        %881 = vmatprep.subr.mxu0 0.0
        %882 = vmatpush1.xpose.msra.mxu0 %v558
        %883 = vmatprep.subr.mxu0 0.0
        %884 = vmatpush1.xpose.msra.mxu0 %v561
        %885 = vmatprep.subr.mxu0 0.0
        %886 = vmatpush1.xpose.msra.mxu0 %v564
        %887 = vmatprep.subr.mxu0 0.0
        %888 = vmatpush1.xpose.msra.mxu0 %v567
        %889 = vmatprep.subr.mxu0 0.0
        %890 = vmatpush1.xpose.msra.mxu0 %v570
        %891 = vmatprep.subr.mxu0 0.0
        %892 = vmatpush1.xpose.msra.mxu0 %v573
        %893 = vmatprep.subr.mxu0 0.0
        %894 = vmatpush1.xpose.msra.mxu0 %v576
        %895 = vmatprep.subr.mxu0 0.0
        %896 = vmatpush1.xpose.msra.mxu0 %v579
        %897 = vmatprep.subr.mxu0 0.0
        %898 = vmatpush1.xpose.msra.mxu0 %v582
        %899 = vmatprep.subr.mxu0 0.0
        %900 = vmatpush1.xpose.msra.mxu0 %v585
        %901 = vmatprep.subr.mxu0 0.0
        %902 = vmatpush1.xpose.msra.mxu0 %v588
        %903 = vmatprep.subr.mxu0 0.0
        %904 = vmatpush1.xpose.msra.mxu0 %v591
        %905 = vmatprep.subr.mxu0 0.0
        %906 = vmatpush1.xpose.msra.mxu0 %v594
        %907 = vmatprep.subr.mxu0 0.0
        %908 = vmatpush1.xpose.msra.mxu0 %v597
        %909 = vmatprep.subr.mxu0 0.0
        %910 = vmatpush1.xpose.msra.mxu0 %v600
        %911 = vmatprep.subr.mxu0 0.0
        %912 = vmatpush1.xpose.msra.mxu0 %v603
        %913 = vmatprep.subr.mxu0 0.0
        %914 = vmatpush1.xpose.msra.mxu0 %v606
        %915 = vmatprep.subr.mxu0 0.0
        %916 = vmatpush1.xpose.msra.mxu0 %v609
        %917 = vmatprep.subr.mxu0 0.0
        %918 = vmatpush1.xpose.msra.mxu0 %v612
        %919 = vmatprep.subr.mxu0 0.0
        %920 = vmatpush1.xpose.msra.mxu0 %v615
        %921 = vmatprep.subr.mxu0 0.0
        %922 = vmatpush1.xpose.msra.mxu0 %v618
        %923 = vmatprep.subr.mxu0 0.0
        %924 = vmatpush1.xpose.msra.mxu0 %v621
        %925 = vmatprep.mubr.f32.mxu0 0.0
        %926 = vmatmul.mubr.f32.gmra.mrb[0].mxu0 %v333
        %v927 = vpop.f32.mrb[0].mxu0
        %v928 = vadd.f32 %v329, %v927
        %v929 = vpop.f32.mrb[0].mxu0
        %v930 = vadd.f32 %v329, %v929
        %931 = vdwg.mxu0
        %932 = vmatprep.subr.mxu0 0.0
        %933 = vmatpush1.xpose.msra.mxu0 %v624
        %934 = vmatprep.subr.mxu0 0.0
        %935 = vmatpush1.xpose.msra.mxu0 %v627
        %936 = vmatprep.subr.mxu0 0.0
        %937 = vmatpush1.xpose.msra.mxu0 %v630
        %938 = vmatprep.subr.mxu0 0.0
        %939 = vmatpush1.xpose.msra.mxu0 %v633
        %940 = vmatprep.subr.mxu0 0.0
        %941 = vmatpush1.xpose.msra.mxu0 %v636
        %942 = vmatprep.subr.mxu0 0.0
        %943 = vmatpush1.xpose.msra.mxu0 %v639
        %944 = vmatprep.subr.mxu0 0.0
        %945 = vmatpush1.xpose.msra.mxu0 %v642
        %946 = vmatprep.subr.mxu0 0.0
        %947 = vmatpush1.xpose.msra.mxu0 %v645
        %948 = vmatprep.subr.mxu0 0.0
        %949 = vmatpush1.xpose.msra.mxu0 %v648
        %950 = vmatprep.subr.mxu0 0.0
        %951 = vmatpush1.xpose.msra.mxu0 %v651
        %952 = vmatprep.subr.mxu0 0.0
        %953 = vmatpush1.xpose.msra.mxu0 %v654
        %954 = vmatprep.subr.mxu0 0.0
        %955 = vmatpush1.xpose.msra.mxu0 %v657
        %956 = vmatprep.subr.mxu0 0.0
        %957 = vmatpush1.xpose.msra.mxu0 %v660
        %958 = vmatprep.subr.mxu0 0.0
        %959 = vmatpush1.xpose.msra.mxu0 %v663
        %960 = vmatprep.subr.mxu0 0.0
        %961 = vmatpush1.xpose.msra.mxu0 %v666
        %962 = vmatprep.subr.mxu0 0.0
        %963 = vmatpush1.xpose.msra.mxu0 %v669
        %964 = vmatprep.subr.mxu0 0.0
        %965 = vmatpush1.xpose.msra.mxu0 %v672
        %966 = vmatprep.subr.mxu0 0.0
        %967 = vmatpush1.xpose.msra.mxu0 %v675
        %968 = vmatprep.subr.mxu0 0.0
        %969 = vmatpush1.xpose.msra.mxu0 %v678
        %970 = vmatprep.subr.mxu0 0.0
        %971 = vmatpush1.xpose.msra.mxu0 %v681
        %972 = vmatprep.subr.mxu0 0.0
        %973 = vmatpush1.xpose.msra.mxu0 %v684
        %974 = vmatprep.subr.mxu0 0.0
        %975 = vmatpush1.xpose.msra.mxu0 %v687
        %976 = vmatprep.subr.mxu0 0.0
        %977 = vmatpush1.xpose.msra.mxu0 %v690
        %978 = vmatprep.subr.mxu0 0.0
        %979 = vmatpush1.xpose.msra.mxu0 %v693
        %980 = vmatprep.subr.mxu0 0.0
        %981 = vmatpush1.xpose.msra.mxu0 %v696
        %982 = vmatprep.subr.mxu0 0.0
        %983 = vmatpush1.xpose.msra.mxu0 %v699
        %984 = vmatprep.subr.mxu0 0.0
        %985 = vmatpush1.xpose.msra.mxu0 %v702
        %986 = vmatprep.subr.mxu0 0.0
        %987 = vmatpush1.xpose.msra.mxu0 %v705
        %988 = vmatprep.subr.mxu0 0.0
        %989 = vmatpush1.xpose.msra.mxu0 %v708
        %990 = vmatprep.subr.mxu0 0.0
        %991 = vmatpush1.xpose.msra.mxu0 %v711
        %992 = vmatprep.subr.mxu0 0.0
        %993 = vmatpush1.xpose.msra.mxu0 %v714
        %994 = vmatprep.subr.mxu0 0.0
        %995 = vmatpush1.xpose.msra.mxu0 %v717
        %996 = vmatprep.mubr.f32.mxu0 0.0
        %997 = vmatmul.mubr.f32.gmra.mrb[0].mxu0 %v333
        %v998 = vpop.f32.mrb[0].mxu0
        %v999 = vadd.f32 %v329, %v998
        %v1000 = vpop.f32.mrb[0].mxu0
        %v1001 = vadd.f32 %v329, %v1000
        %1002 = vdwg.mxu0
        %v1011 = vcombine.low %v786, %v788
        %v1012 = vcombine.low %v857, %v859
        %v1014 = vunpack.c.l.s4 1983009808
        %v1015 = vunpack.c.0.s8 %v1014
        %v1016 = vlaneseq
        %v1017 = vshrl.u32 %v1016, 7
        %v1018 = vsub.s32 %v1015, %v1017
        %v1019 = vrot.slane %v1011, %v1018
        %v1021 = vunpack.c.l.s4 1983009808
        %v1022 = vunpack.c.0.s8 %v1021
        %v1023 = vlaneseq
        %v1024 = vshrl.u32 %v1023, 7
        %v1025 = vsub.s32 %v1022, %v1024
        %v1026 = vrot.slane %v1012, %v1025
        %v1027 = vcombine.low %v1019, %v1026
        %v1028 = vcombine.low %v928, %v930
        %v1029 = vcombine.low %v999, %v1001
        %v1031 = vunpack.c.l.s4 1983009808
        %v1032 = vunpack.c.0.s8 %v1031
        %v1033 = vlaneseq
        %v1034 = vshrl.u32 %v1033, 7
        %v1035 = vsub.s32 %v1032, %v1034
        %v1036 = vrot.slane %v1028, %v1035
        %v1038 = vunpack.c.l.s4 1983009808
        %v1039 = vunpack.c.0.s8 %v1038
        %v1040 = vlaneseq
        %v1041 = vshrl.u32 %v1040, 7
        %v1042 = vsub.s32 %v1039, %v1041
        %v1043 = vrot.slane %v1029, %v1042
        %v1044 = vcombine.low %v1036, %v1043
        %1047 = vst [vmem:[%s176] sm:$0xff] %v1027
        %1048 = vst [vmem:[%s176 + $0x8] sm:$0xff] %v1044
        %s1049 = sand.u32 %s93, 1
        %s1050 = scalar_lea.sflag [#allocation3], %s1049
        %s1051 = sand.u32 %s93, 1
        %s1052 = smul.addr %s1051, 16
        %s1053 = scalar_lea.vmem [#allocation2], %s1052
        // Predicated region
        $region33: #{tpu_custom_call.1} parent=31 // pred_check
          %p1054 = pneg %p103
        $region34: #{tpu_custom_call.1} parent=31 // pred_check_branch
          %1056 = sbr.rel (%p1054) target = $region36
        $region35: #{tpu_custom_call.1} parent=31 // pred_region
          %s1057 = smul.u32 8, %s17
          %s1058 = ssub.s32 33, %s1057
          %p1059 = scmp.lt.s32.totalorder %s1058, 8
          %s1060 = scalar_select %p1059, %s1058, 8
          %s1061 = smul.u32 32, %s1060
          %s1063 = ssub.s32 256, %s1061
          %1064 = vsyncadd %s1050, %s1063
          %p1065 = scmp.ne.s32.totalorder 0, %s1061
          %s1066 = smul.addr %s1057, 32
          %s1067 = scalar_lea.hbm %s3, %s1066
          %s1068 = smul.u32 %s1060, 2
          %s1069 = sshll.u32 %s1068, 4
          %s1070 = sshll.u32 %s1053, 4
          %s1071 = int_to_ptr.vmem [resolvable:$true] %s1070
          %1073 = dma.vmem_to_hbm [thread:$0]  (%p1065), %s1071, %s1069, %s1067, %s1050
        $region36: #{tpu_custom_call.1} parent=31 // pred_fallthru
          _
      $region32: #{tpu_custom_call.1} parent=5 // pred_fallthru
        _
      %p1074 = scmp.le.s32.totalorder 2, %s12
      // Predicated region
      $region37: #{tpu_custom_call.1} parent=5 // pred_check
        %p1075 = pneg %p1074
      $region38: #{tpu_custom_call.1} parent=5 // pred_check_branch
        %1077 = sbr.rel (%p1075) target = $region40
      $region39: #{tpu_custom_call.1} parent=5 // pred_region
        %s1078 = ssub.s32 %s12, 2
        // Predicated region
        $region41: #{tpu_custom_call.1} parent=39 // pred_check
          %p1079 = pneg %p109
        $region42: #{tpu_custom_call.1} parent=39 // pred_check_branch
          %1081 = sbr.rel (%p1079) target = $region44
        $region43: #{tpu_custom_call.1} parent=39 // pred_region
          %s1082 = sand.u32 %s94, 1
          %s1083 = scalar_lea.sflag [#allocation3], %s1082
          %s1084 = sand.u32 %s94, 1
          %s1085 = smul.addr %s1084, 16
          %s1086 = scalar_lea.vmem [#allocation2], %s1085
          %1087 = dma.done %s1083, 256
        $region44: #{tpu_custom_call.1} parent=39 // pred_fallthru
          _
      $region40: #{tpu_custom_call.1} parent=5 // pred_fallthru
        _
    $region6: #{tpu_custom_call.1} parent=1 // loop_footer
      %s16 = sadd.s32 1, %s12
    $region7: #{tpu_custom_call.1} parent=1 // loop_footer_branch
      %11 = sbr.rel target = $region3
    $region8: #{tpu_custom_call.1} parent=1 // loop_exit
      _
    %1088 = vsyncpa [#allocation3], 1
    %s1089 = scalar_lea.sflag [#allocation3], 1
    %1090 = vsyncpa %s1089, 1

</llo_original>
